<compile_context>
chip_gen: v7x
topology: tpu7x:2x2x1
jax: 0.10.0
libtpu: 0.0.40
codegen_flags: <defaults>
</compile_context>

<pallas_src>
import jax
import jax.numpy as jnp
from jax.experimental import pallas as pl
from jax.experimental.pallas import tpu as pltpu

_COUT_PAD = 8          # pad output channels to a full f32 sublane group
_MAX_TILE_HW = 65536   # lane-dense tile (multiple of 128); out block ~2 MiB f32


def _conv1x1_kernel(w_ref, b_ref, x_ref, o_ref):
    """1x1 conv on one lane-dense spatial tile, computed on the VPU.

    w_ref: SMEM (COUT_PAD, CIN) f32   conv weights (zero-padded rows)
    b_ref: SMEM (COUT_PAD,)     f32   bias (zero-padded)
    x_ref: VMEM (1, CIN, TILE)  f32   pixels, channels in sublanes
    o_ref: VMEM (1, COUT_PAD, TILE) f32
    """
    cin = x_ref.shape[1]
    cout = o_ref.shape[1]
    xb = x_ref[0]                                  # (CIN, TILE) single vload block
    rows = []
    for c in range(cout):                          # static unroll: 8 output rows
        acc = xb[0:1, :] * w_ref[c, 0]
        for k in range(1, cin):                    # static unroll: K=3 FMAs
            acc = acc + xb[k:k + 1, :] * w_ref[c, k]
        rows.append(acc + b_ref[c])
    # One full (8, TILE) store: unmasked in both sublane and lane directions.
    o_ref[0] = jnp.concatenate(rows, axis=0)


def _conv1x1_nchw(x, weight, bias):
    """out = conv2d(x, weight, bias, kernel_size=1) in NCHW layout."""
    n, cin, h, w = x.shape
    cout = weight.shape[0]
    hw = h * w

    # Lane-dense layout: (N, Cin, H*W).  Pure reshape, no transpose.
    x3 = x.reshape(n, cin, hw).astype(jnp.float32)

    # Tile the spatial axis: full axis when small, else multiple-of-128 tiles.
    if hw <= _MAX_TILE_HW:
        tile, hw_pad = hw, hw
    else:
        tile = _MAX_TILE_HW
        hw_pad = pl.cdiv(hw, tile) * tile
    if hw_pad != hw:
        x3 = jnp.pad(x3, ((0, 0), (0, 0), (0, hw_pad - hw)))

    # Tiny weights/bias -> SMEM, zero-padded to 8 output channels.
    w2d = weight.reshape(cout, cin).astype(jnp.float32)
    w_pad = jnp.zeros((_COUT_PAD, cin), jnp.float32).at[:cout].set(w2d)
    b_pad = jnp.zeros((_COUT_PAD,), jnp.float32).at[:cout].set(
        bias.astype(jnp.float32))

    grid = (n, hw_pad // tile)
    out = pl.pallas_call(
        _conv1x1_kernel,
        out_shape=jax.ShapeDtypeStruct((n, _COUT_PAD, hw_pad), jnp.float32),
        grid=grid,
        in_specs=[
            pl.BlockSpec(memory_space=pltpu.MemorySpace.SMEM),   # weights
            pl.BlockSpec(memory_space=pltpu.MemorySpace.SMEM),   # bias
            pl.BlockSpec((1, cin, tile), lambda ni, ti: (ni, 0, ti)),
        ],
        out_specs=pl.BlockSpec((1, _COUT_PAD, tile), lambda ni, ti: (ni, 0, ti)),
        compiler_params=pltpu.CompilerParams(
            dimension_semantics=("parallel", "parallel")),
    )(w_pad, b_pad, x3)

    # (N, COUT_PAD, HW_pad) -> (N, Cout, H, W): slice + reshape, no transpose.
    return out[:, :cout, :hw].reshape(n, cout, h, w).astype(x.dtype)


class MutableConv:
    """JAX/Pallas port of the PyTorch MutableConv module (forward pass only)."""

    def __init__(self, key):
        k1, k2, k3, k4 = jax.random.split(key, 4)
        # nn.Conv2d(3, 3, kernel_size=1): weight (3, 3, 1, 1), bias (3,)
        self.w1 = jax.random.normal(k1, (3, 3, 1, 1), jnp.float32) * 0.1
        self.b1 = jax.random.normal(k2, (3,), jnp.float32) * 0.1
        # nn.Conv2d(3, 5, kernel_size=1): weight (5, 3, 1, 1), bias (5,)
        self.w2 = jax.random.normal(k3, (5, 3, 1, 1), jnp.float32) * 0.1
        self.b2 = jax.random.normal(k4, (5,), jnp.float32) * 0.1

    def __call__(self, x, index: int):
        # `index` is a static Python int, matching the PyTorch forward signature.
        if index == 0:
            weight, bias = self.w1, self.b1
        else:
            weight, bias = self.w2, self.b2
        return _conv1x1_nchw(x, weight, bias)


def _reference(x, weight, bias):
    # Pure-JAX reference for a 1x1 conv (NCHW).
    w2d = weight.reshape(weight.shape[0], weight.shape[1])
    return jnp.einsum("nchw,oc->nohw", x, w2d) + bias[None, :, None, None]


if __name__ == "__main__":
    key = jax.random.PRNGKey(0)
    kx, kp = jax.random.split(key)

    model = MutableConv(kp)
    x = jax.random.normal(kx, (2, 3, 16, 16), jnp.float32)

    out0 = jax.block_until_ready(model(x, index=0))   # (2, 3, 16, 16)
    out1 = jax.block_until_ready(model(x, index=1))   # (2, 5, 16, 16)

    ref0 = _reference(x, model.w1, model.b1)
    ref1 = _reference(x, model.w2, model.b2)

    assert out0.shape == (2, 3, 16, 16)
    assert out1.shape == (2, 5, 16, 16)
    assert jnp.allclose(out0, ref0, atol=1e-5, rtol=1e-5)
    assert jnp.allclose(out1, ref1, atol=1e-5, rtol=1e-5)

    print("KERNEL_OK")
</pallas_src>

<mosaic_0001>
module attributes {stable_mosaic.version = 11 : i64} {
  func.func @_conv1x1_kernel(%arg0: i32, %arg1: i32, %arg2: memref<8x3xf32, #tpu.memory_space<smem>>, %arg3: memref<8xf32, #tpu.memory_space<smem>>, %arg4: memref<1x3x256xf32, #tpu.memory_space<vmem>>, %arg5: memref<1x8x256xf32, #tpu.memory_space<vmem>>) attributes {dimension_semantics = [#tpu.dimension_semantics<parallel>, #tpu.dimension_semantics<parallel>], iteration_bounds = array<i64: 2, 1>, scalar_prefetch = 0 : i64, scratch_operands = 0 : i64, tpu.core_type = #tpu.core_type<tc>, window_params = [{transform_indices = @transform_0, window_bounds = array<i64: 8, 3>}, {transform_indices = @transform_1, window_bounds = array<i64: 8>}, {transform_indices = @transform_2, window_bounds = array<i64: 1, 3, 256>}, {transform_indices = @transform_3, window_bounds = array<i64: 1, 8, 256>}]} {
    %c0 = arith.constant 0 : index
    %c0_0 = arith.constant 0 : index
    %c0_1 = arith.constant 0 : index
    %0 = vector.load %arg4[%c0, %c0_0, %c0_1] : memref<1x3x256xf32, #tpu.memory_space<vmem>>, vector<1x3x256xf32>
    %1 = vector.shape_cast %0 : vector<1x3x256xf32> to vector<3x256xf32>
    %2 = vector.extract_strided_slice %1 {offsets = [0, 0], sizes = [1, 256], strides = [1, 1]} : vector<3x256xf32> to vector<1x256xf32>
    %c0_2 = arith.constant 0 : index
    %c0_3 = arith.constant 0 : index
    %3 = memref.load %arg2[%c0_2, %c0_3] : memref<8x3xf32, #tpu.memory_space<smem>>
    %4 = vector.broadcast %3 : f32 to vector<1x256xf32>
    %5 = arith.mulf %2, %4 : vector<1x256xf32>
    %6 = vector.extract_strided_slice %1 {offsets = [1, 0], sizes = [1, 256], strides = [1, 1]} : vector<3x256xf32> to vector<1x256xf32>
    %c0_4 = arith.constant 0 : index
    %c1 = arith.constant 1 : index
    %7 = memref.load %arg2[%c0_4, %c1] : memref<8x3xf32, #tpu.memory_space<smem>>
    %8 = vector.broadcast %7 : f32 to vector<1x256xf32>
    %9 = arith.mulf %6, %8 : vector<1x256xf32>
    %10 = arith.addf %5, %9 : vector<1x256xf32>
    %11 = vector.extract_strided_slice %1 {offsets = [2, 0], sizes = [1, 256], strides = [1, 1]} : vector<3x256xf32> to vector<1x256xf32>
    %c0_5 = arith.constant 0 : index
    %c2 = arith.constant 2 : index
    %12 = memref.load %arg2[%c0_5, %c2] : memref<8x3xf32, #tpu.memory_space<smem>>
    %13 = vector.broadcast %12 : f32 to vector<1x256xf32>
    %14 = arith.mulf %11, %13 : vector<1x256xf32>
    %15 = arith.addf %10, %14 : vector<1x256xf32>
    %c0_6 = arith.constant 0 : index
    %16 = memref.load %arg3[%c0_6] : memref<8xf32, #tpu.memory_space<smem>>
    %17 = vector.broadcast %16 : f32 to vector<1x256xf32>
    %18 = arith.addf %15, %17 : vector<1x256xf32>
    %19 = vector.extract_strided_slice %1 {offsets = [0, 0], sizes = [1, 256], strides = [1, 1]} : vector<3x256xf32> to vector<1x256xf32>
    %c1_7 = arith.constant 1 : index
    %c0_8 = arith.constant 0 : index
    %20 = memref.load %arg2[%c1_7, %c0_8] : memref<8x3xf32, #tpu.memory_space<smem>>
    %21 = vector.broadcast %20 : f32 to vector<1x256xf32>
    %22 = arith.mulf %19, %21 : vector<1x256xf32>
    %23 = vector.extract_strided_slice %1 {offsets = [1, 0], sizes = [1, 256], strides = [1, 1]} : vector<3x256xf32> to vector<1x256xf32>
    %c1_9 = arith.constant 1 : index
    %c1_10 = arith.constant 1 : index
    %24 = memref.load %arg2[%c1_9, %c1_10] : memref<8x3xf32, #tpu.memory_space<smem>>
    %25 = vector.broadcast %24 : f32 to vector<1x256xf32>
    %26 = arith.mulf %23, %25 : vector<1x256xf32>
    %27 = arith.addf %22, %26 : vector<1x256xf32>
    %28 = vector.extract_strided_slice %1 {offsets = [2, 0], sizes = [1, 256], strides = [1, 1]} : vector<3x256xf32> to vector<1x256xf32>
    %c1_11 = arith.constant 1 : index
    %c2_12 = arith.constant 2 : index
    %29 = memref.load %arg2[%c1_11, %c2_12] : memref<8x3xf32, #tpu.memory_space<smem>>
    %30 = vector.broadcast %29 : f32 to vector<1x256xf32>
    %31 = arith.mulf %28, %30 : vector<1x256xf32>
    %32 = arith.addf %27, %31 : vector<1x256xf32>
    %c1_13 = arith.constant 1 : index
    %33 = memref.load %arg3[%c1_13] : memref<8xf32, #tpu.memory_space<smem>>
    %34 = vector.broadcast %33 : f32 to vector<1x256xf32>
    %35 = arith.addf %32, %34 : vector<1x256xf32>
    %36 = vector.extract_strided_slice %1 {offsets = [0, 0], sizes = [1, 256], strides = [1, 1]} : vector<3x256xf32> to vector<1x256xf32>
    %c2_14 = arith.constant 2 : index
    %c0_15 = arith.constant 0 : index
    %37 = memref.load %arg2[%c2_14, %c0_15] : memref<8x3xf32, #tpu.memory_space<smem>>
    %38 = vector.broadcast %37 : f32 to vector<1x256xf32>
    %39 = arith.mulf %36, %38 : vector<1x256xf32>
    %40 = vector.extract_strided_slice %1 {offsets = [1, 0], sizes = [1, 256], strides = [1, 1]} : vector<3x256xf32> to vector<1x256xf32>
    %c2_16 = arith.constant 2 : index
    %c1_17 = arith.constant 1 : index
    %41 = memref.load %arg2[%c2_16, %c1_17] : memref<8x3xf32, #tpu.memory_space<smem>>
    %42 = vector.broadcast %41 : f32 to vector<1x256xf32>
    %43 = arith.mulf %40, %42 : vector<1x256xf32>
    %44 = arith.addf %39, %43 : vector<1x256xf32>
    %45 = vector.extract_strided_slice %1 {offsets = [2, 0], sizes = [1, 256], strides = [1, 1]} : vector<3x256xf32> to vector<1x256xf32>
    %c2_18 = arith.constant 2 : index
    %c2_19 = arith.constant 2 : index
    %46 = memref.load %arg2[%c2_18, %c2_19] : memref<8x3xf32, #tpu.memory_space<smem>>
    %47 = vector.broadcast %46 : f32 to vector<1x256xf32>
    %48 = arith.mulf %45, %47 : vector<1x256xf32>
    %49 = arith.addf %44, %48 : vector<1x256xf32>
    %c2_20 = arith.constant 2 : index
    %50 = memref.load %arg3[%c2_20] : memref<8xf32, #tpu.memory_space<smem>>
    %51 = vector.broadcast %50 : f32 to vector<1x256xf32>
    %52 = arith.addf %49, %51 : vector<1x256xf32>
    %53 = vector.extract_strided_slice %1 {offsets = [0, 0], sizes = [1, 256], strides = [1, 1]} : vector<3x256xf32> to vector<1x256xf32>
    %c3 = arith.constant 3 : index
    %c0_21 = arith.constant 0 : index
    %54 = memref.load %arg2[%c3, %c0_21] : memref<8x3xf32, #tpu.memory_space<smem>>
    %55 = vector.broadcast %54 : f32 to vector<1x256xf32>
    %56 = arith.mulf %53, %55 : vector<1x256xf32>
    %57 = vector.extract_strided_slice %1 {offsets = [1, 0], sizes = [1, 256], strides = [1, 1]} : vector<3x256xf32> to vector<1x256xf32>
    %c3_22 = arith.constant 3 : index
    %c1_23 = arith.constant 1 : index
    %58 = memref.load %arg2[%c3_22, %c1_23] : memref<8x3xf32, #tpu.memory_space<smem>>
    %59 = vector.broadcast %58 : f32 to vector<1x256xf32>
    %60 = arith.mulf %57, %59 : vector<1x256xf32>
    %61 = arith.addf %56, %60 : vector<1x256xf32>
    %62 = vector.extract_strided_slice %1 {offsets = [2, 0], sizes = [1, 256], strides = [1, 1]} : vector<3x256xf32> to vector<1x256xf32>
    %c3_24 = arith.constant 3 : index
    %c2_25 = arith.constant 2 : index
    %63 = memref.load %arg2[%c3_24, %c2_25] : memref<8x3xf32, #tpu.memory_space<smem>>
    %64 = vector.broadcast %63 : f32 to vector<1x256xf32>
    %65 = arith.mulf %62, %64 : vector<1x256xf32>
    %66 = arith.addf %61, %65 : vector<1x256xf32>
    %c3_26 = arith.constant 3 : index
    %67 = memref.load %arg3[%c3_26] : memref<8xf32, #tpu.memory_space<smem>>
    %68 = vector.broadcast %67 : f32 to vector<1x256xf32>
    %69 = arith.addf %66, %68 : vector<1x256xf32>
    %70 = vector.extract_strided_slice %1 {offsets = [0, 0], sizes = [1, 256], strides = [1, 1]} : vector<3x256xf32> to vector<1x256xf32>
    %c4 = arith.constant 4 : index
    %c0_27 = arith.constant 0 : index
    %71 = memref.load %arg2[%c4, %c0_27] : memref<8x3xf32, #tpu.memory_space<smem>>
    %72 = vector.broadcast %71 : f32 to vector<1x256xf32>
    %73 = arith.mulf %70, %72 : vector<1x256xf32>
    %74 = vector.extract_strided_slice %1 {offsets = [1, 0], sizes = [1, 256], strides = [1, 1]} : vector<3x256xf32> to vector<1x256xf32>
    %c4_28 = arith.constant 4 : index
    %c1_29 = arith.constant 1 : index
    %75 = memref.load %arg2[%c4_28, %c1_29] : memref<8x3xf32, #tpu.memory_space<smem>>
    %76 = vector.broadcast %75 : f32 to vector<1x256xf32>
    %77 = arith.mulf %74, %76 : vector<1x256xf32>
    %78 = arith.addf %73, %77 : vector<1x256xf32>
    %79 = vector.extract_strided_slice %1 {offsets = [2, 0], sizes = [1, 256], strides = [1, 1]} : vector<3x256xf32> to vector<1x256xf32>
    %c4_30 = arith.constant 4 : index
    %c2_31 = arith.constant 2 : index
    %80 = memref.load %arg2[%c4_30, %c2_31] : memref<8x3xf32, #tpu.memory_space<smem>>
    %81 = vector.broadcast %80 : f32 to vector<1x256xf32>
    %82 = arith.mulf %79, %81 : vector<1x256xf32>
    %83 = arith.addf %78, %82 : vector<1x256xf32>
    %c4_32 = arith.constant 4 : index
    %84 = memref.load %arg3[%c4_32] : memref<8xf32, #tpu.memory_space<smem>>
    %85 = vector.broadcast %84 : f32 to vector<1x256xf32>
    %86 = arith.addf %83, %85 : vector<1x256xf32>
    %87 = vector.extract_strided_slice %1 {offsets = [0, 0], sizes = [1, 256], strides = [1, 1]} : vector<3x256xf32> to vector<1x256xf32>
    %c5 = arith.constant 5 : index
    %c0_33 = arith.constant 0 : index
    %88 = memref.load %arg2[%c5, %c0_33] : memref<8x3xf32, #tpu.memory_space<smem>>
    %89 = vector.broadcast %88 : f32 to vector<1x256xf32>
    %90 = arith.mulf %87, %89 : vector<1x256xf32>
    %91 = vector.extract_strided_slice %1 {offsets = [1, 0], sizes = [1, 256], strides = [1, 1]} : vector<3x256xf32> to vector<1x256xf32>
    %c5_34 = arith.constant 5 : index
    %c1_35 = arith.constant 1 : index
    %92 = memref.load %arg2[%c5_34, %c1_35] : memref<8x3xf32, #tpu.memory_space<smem>>
    %93 = vector.broadcast %92 : f32 to vector<1x256xf32>
    %94 = arith.mulf %91, %93 : vector<1x256xf32>
    %95 = arith.addf %90, %94 : vector<1x256xf32>
    %96 = vector.extract_strided_slice %1 {offsets = [2, 0], sizes = [1, 256], strides = [1, 1]} : vector<3x256xf32> to vector<1x256xf32>
    %c5_36 = arith.constant 5 : index
    %c2_37 = arith.constant 2 : index
    %97 = memref.load %arg2[%c5_36, %c2_37] : memref<8x3xf32, #tpu.memory_space<smem>>
    %98 = vector.broadcast %97 : f32 to vector<1x256xf32>
    %99 = arith.mulf %96, %98 : vector<1x256xf32>
    %100 = arith.addf %95, %99 : vector<1x256xf32>
    %c5_38 = arith.constant 5 : index
    %101 = memref.load %arg3[%c5_38] : memref<8xf32, #tpu.memory_space<smem>>
    %102 = vector.broadcast %101 : f32 to vector<1x256xf32>
    %103 = arith.addf %100, %102 : vector<1x256xf32>
    %104 = vector.extract_strided_slice %1 {offsets = [0, 0], sizes = [1, 256], strides = [1, 1]} : vector<3x256xf32> to vector<1x256xf32>
    %c6 = arith.constant 6 : index
    %c0_39 = arith.constant 0 : index
    %105 = memref.load %arg2[%c6, %c0_39] : memref<8x3xf32, #tpu.memory_space<smem>>
    %106 = vector.broadcast %105 : f32 to vector<1x256xf32>
    %107 = arith.mulf %104, %106 : vector<1x256xf32>
    %108 = vector.extract_strided_slice %1 {offsets = [1, 0], sizes = [1, 256], strides = [1, 1]} : vector<3x256xf32> to vector<1x256xf32>
    %c6_40 = arith.constant 6 : index
    %c1_41 = arith.constant 1 : index
    %109 = memref.load %arg2[%c6_40, %c1_41] : memref<8x3xf32, #tpu.memory_space<smem>>
    %110 = vector.broadcast %109 : f32 to vector<1x256xf32>
    %111 = arith.mulf %108, %110 : vector<1x256xf32>
    %112 = arith.addf %107, %111 : vector<1x256xf32>
    %113 = vector.extract_strided_slice %1 {offsets = [2, 0], sizes = [1, 256], strides = [1, 1]} : vector<3x256xf32> to vector<1x256xf32>
    %c6_42 = arith.constant 6 : index
    %c2_43 = arith.constant 2 : index
    %114 = memref.load %arg2[%c6_42, %c2_43] : memref<8x3xf32, #tpu.memory_space<smem>>
    %115 = vector.broadcast %114 : f32 to vector<1x256xf32>
    %116 = arith.mulf %113, %115 : vector<1x256xf32>
    %117 = arith.addf %112, %116 : vector<1x256xf32>
    %c6_44 = arith.constant 6 : index
    %118 = memref.load %arg3[%c6_44] : memref<8xf32, #tpu.memory_space<smem>>
    %119 = vector.broadcast %118 : f32 to vector<1x256xf32>
    %120 = arith.addf %117, %119 : vector<1x256xf32>
    %121 = vector.extract_strided_slice %1 {offsets = [0, 0], sizes = [1, 256], strides = [1, 1]} : vector<3x256xf32> to vector<1x256xf32>
    %c7 = arith.constant 7 : index
    %c0_45 = arith.constant 0 : index
    %122 = memref.load %arg2[%c7, %c0_45] : memref<8x3xf32, #tpu.memory_space<smem>>
    %123 = vector.broadcast %122 : f32 to vector<1x256xf32>
    %124 = arith.mulf %121, %123 : vector<1x256xf32>
    %125 = vector.extract_strided_slice %1 {offsets = [1, 0], sizes = [1, 256], strides = [1, 1]} : vector<3x256xf32> to vector<1x256xf32>
    %c7_46 = arith.constant 7 : index
    %c1_47 = arith.constant 1 : index
    %126 = memref.load %arg2[%c7_46, %c1_47] : memref<8x3xf32, #tpu.memory_space<smem>>
    %127 = vector.broadcast %126 : f32 to vector<1x256xf32>
    %128 = arith.mulf %125, %127 : vector<1x256xf32>
    %129 = arith.addf %124, %128 : vector<1x256xf32>
    %130 = vector.extract_strided_slice %1 {offsets = [2, 0], sizes = [1, 256], strides = [1, 1]} : vector<3x256xf32> to vector<1x256xf32>
    %c7_48 = arith.constant 7 : index
    %c2_49 = arith.constant 2 : index
    %131 = memref.load %arg2[%c7_48, %c2_49] : memref<8x3xf32, #tpu.memory_space<smem>>
    %132 = vector.broadcast %131 : f32 to vector<1x256xf32>
    %133 = arith.mulf %130, %132 : vector<1x256xf32>
    %134 = arith.addf %129, %133 : vector<1x256xf32>
    %c7_50 = arith.constant 7 : index
    %135 = memref.load %arg3[%c7_50] : memref<8xf32, #tpu.memory_space<smem>>
    %136 = vector.broadcast %135 : f32 to vector<1x256xf32>
    %137 = arith.addf %134, %136 : vector<1x256xf32>
    %138 = tpu.concatenate %18, %35, %52, %69, %86, %103, %120, %137 in 0 : vector<1x256xf32>, vector<1x256xf32>, vector<1x256xf32>, vector<1x256xf32>, vector<1x256xf32>, vector<1x256xf32>, vector<1x256xf32>, vector<1x256xf32> -> vector<8x256xf32>
    %c0_51 = arith.constant 0 : index
    %c0_52 = arith.constant 0 : index
    %c0_53 = arith.constant 0 : index
    %139 = vector.load %arg5[%c0_51, %c0_52, %c0_53] : memref<1x8x256xf32, #tpu.memory_space<vmem>>, vector<1x8x256xf32>
    %140 = vector.shape_cast %139 : vector<1x8x256xf32> to vector<8x256xf32>
    %141 = vector.shape_cast %138 : vector<8x256xf32> to vector<1x8x256xf32>
    tpu.vector_store %arg5[%c0_51, %c0_52, %c0_53], %141 {strides = array<i32>} : memref<1x8x256xf32, #tpu.memory_space<vmem>>, vector<1x8x256xf32>,
    return
  }
  func.func @transform_0(%arg0: i32, %arg1: i32) -> (i32, i32) {
    %c0_i32 = arith.constant 0 : i32
    %c0_i32_0 = arith.constant 0 : i32
    %c0_i32_1 = arith.constant 0 : i32
    return %c0_i32, %c0_i32_0 : i32, i32
  }
  func.func @transform_1(%arg0: i32, %arg1: i32) -> i32 {
    %c0_i32 = arith.constant 0 : i32
    %c0_i32_0 = arith.constant 0 : i32
    return %c0_i32 : i32
  }
  func.func @transform_2(%arg0: i32, %arg1: i32) -> (i32, i32, i32) {
    %c0_i32 = arith.constant 0 : i32
    %c0_i32_0 = arith.constant 0 : i32
    return %arg0, %c0_i32, %arg1 : i32, i32, i32
  }
  func.func @transform_3(%arg0: i32, %arg1: i32) -> (i32, i32, i32) {
    %c0_i32 = arith.constant 0 : i32
    %c0_i32_0 = arith.constant 0 : i32
    return %arg0, %c0_i32, %arg1 : i32, i32, i32
  }
}

</mosaic_0001>

<llo_original>
// kernel: tpu_custom_call.1
$region0: #{tpu_custom_call.1}
  #allocation0 [shape = 'u32[]', space=smem, size = 0x4, offset = 0x4, fixed_abs, tag = 'smem constant byte address 0x4 - core index']
  #allocation1 [shape = 'u32[144,128]{1,0:T(1,128)}', space=vmem, size = 0x12000, scoped, tag = 'internal scratch']
  %s0 = inlined_call_operand.vmem [shape: f32[8,3], index: 0, kind: input, shape index: {}]
  %s1 = inlined_call_operand.vmem [shape: f32[8], index: 1, kind: input, shape index: {}]
  %s2 = inlined_call_operand.vmem [shape: f32[2,3,256], index: 2, kind: input, shape index: {}]
  %s3 = inlined_call_operand.hbm [shape: f32[2,8,256], index: 3, kind: output, shape index: {}]
  %s4 = sld [smem:[#allocation0]]
  $region53: #{tpu_custom_call.1} parent=0
    _
  %s6 = ssub.s32 1, %s4
  %s7 = scalar_select 0, %s6, %s4
  $region1: #{tpu_custom_call.1} parent=0
    #allocation2 [shape = 'u8[4096]{0}', space=smem, size = 0x1000, scoped, tag = 'input window, operand 0, single buffered']
    #allocation3 [shape = 's32[2]{0}', space=sflag, size = 0x8, scoped, tag = 'scoped memory for tpu_custom_call.1']
    #allocation4 [shape = 's32[2]{0}', space=sflag, size = 0x8, scoped, tag = 'scoped memory for tpu_custom_call.1']
    #allocation5 [shape = 'u8[512]{0}', space=smem, size = 0x200, scoped, tag = 'input window, operand 1, single buffered']
    #allocation6 [shape = 's32[1]{0}', space=sflag, size = 0x4, scoped, tag = 'scoped memory for tpu_custom_call.1']
    #allocation7 [shape = 'u8[16384]{0}', space=vmem, size = 0x4000, scoped, tag = 'output window, operand 0']
    %8 = vsyncpa [#allocation4], 0
    %9 = vsyncpa [#allocation6], 0
    %10 = vsyncpa [#allocation3], 0
    %s11 = scalar_lea.sflag [#allocation3], 1
    %12 = vsyncpa %s11, 0
    loop: start=0, step=1, limit=4
    $region2: #{tpu_custom_call.1} parent=1 // loop_pre_header
      _
    $region3: #{tpu_custom_call.1} parent=1 // loop_header
      %s14 = sphi 0, %s18
      %p15 = scmp.ge.s32.totalorder %s14, 4
      %s21 = sphi 0, %s33
      %s22 = sphi 0, %s29
      %s23 = sphi 0, %s21
      %s24 = sphi 0, %s22
      %s25 = sphi 0, %s23
      %s26 = sphi 0, %s24
      %s34 = sphi 0, %s34
      %s36 = sphi 0, %s34
      %s37 = sphi 0, %s36
      %s51 = sphi 0, %s37
      %s55 = sphi 0, %s55
      %s57 = sphi 0, %s55
      %s58 = sphi 0, %s57
      %s72 = sphi 0, %s58
      %s80 = sphi 0, %s82
      %s83 = sphi 0, %s80
      %s84 = sphi 0, %s83
      %s100 = sphi 0, %s84
      %s108 = sphi 0, %s110
      %s111 = sphi 0, %s108
      %s112 = sphi 0, %s111
      %s128 = sphi 0, %s112
    $region4: #{tpu_custom_call.1} parent=1 // loop_header_branch
      %17 = sbr.rel (%p15) target = $region8
    $region5: #{tpu_custom_call.1} parent=1 // loop_body
      %s19 = ssub.s32 %s14, 1
      %s20 = ssub.s32 %s14, 2
      %s27 = sadd.s32 1, %s22
      %p28 = scmp.ge.s32.totalorder %s27, 1
      %s29 = scalar_select %p28, 0, %s27
      %s30 = sadd.s32 1, %s21
      %s31 = scalar_select %p28, %s30, %s21
      %p32 = scmp.ge.s32.totalorder %s31, 2
      %s33 = scalar_select %p32, 0, %s31
      %s35 = sadd.s32 %s34, 1
      %p38 = scmp.eq.s32.totalorder %s14, 1
      %p39 = scmp.ne.s32.totalorder %s34, %s36
      %p40 = scmp.eq.s32.totalorder %s14, 0
      %p41 = por %p39, %p40
      %p42 = scmp.ne.s32.totalorder %s34, %s36
      %p43 = scmp.eq.s32.totalorder %s19, 1
      %p44 = por %p42, %p43
      %p45 = scmp.ne.s32.totalorder %s36, %s37
      %p46 = scmp.eq.s32.totalorder %s19, 0
      %p47 = por %p45, %p46
      %p48 = scmp.ne.s32.totalorder %s36, %s37
      %p49 = scmp.eq.s32.totalorder %s20, 1
      %p50 = por %p48, %p49
      %p52 = scmp.ne.s32.totalorder %s37, %s51
      %p53 = scmp.eq.s32.totalorder %s20, 0
      %p54 = por %p52, %p53
      %s56 = sadd.s32 %s55, 1
      %p59 = scmp.eq.s32.totalorder %s14, 1
      %p60 = scmp.ne.s32.totalorder %s55, %s57
      %p61 = scmp.eq.s32.totalorder %s14, 0
      %p62 = por %p60, %p61
      %p63 = scmp.ne.s32.totalorder %s55, %s57
      %p64 = scmp.eq.s32.totalorder %s19, 1
      %p65 = por %p63, %p64
      %p66 = scmp.ne.s32.totalorder %s57, %s58
      %p67 = scmp.eq.s32.totalorder %s19, 0
      %p68 = por %p66, %p67
      %p69 = scmp.ne.s32.totalorder %s57, %s58
      %p70 = scmp.eq.s32.totalorder %s20, 1
      %p71 = por %p69, %p70
      %p73 = scmp.ne.s32.totalorder %s58, %s72
      %p74 = scmp.eq.s32.totalorder %s20, 0
      %p75 = por %p73, %p74
      %s76 = ssub.s32 %s21, %s33
      %s77 = ssub.s32 %s22, %s29
      %s78 = sor.u32 %s76, %s77
      %p79 = scmp.eq.s32.totalorder %s78, 0
      %s81 = sadd.s32 %s80, 1
      %s82 = scalar_select %p79, %s80, %s81
      %p85 = pneg %p79
      %p86 = scmp.eq.s32.totalorder %s14, 1
      %p87 = por %p85, %p86
      %p88 = scmp.ne.s32.totalorder %s80, %s83
      %p89 = scmp.eq.s32.totalorder %s14, 0
      %p90 = por %p88, %p89
      %p91 = scmp.ne.s32.totalorder %s80, %s83
      %p92 = scmp.eq.s32.totalorder %s19, 1
      %p93 = por %p91, %p92
      %p94 = scmp.ne.s32.totalorder %s83, %s84
      %p95 = scmp.eq.s32.totalorder %s19, 0
      %p96 = por %p94, %p95
      %p97 = scmp.ne.s32.totalorder %s83, %s84
      %p98 = scmp.eq.s32.totalorder %s20, 1
      %p99 = por %p97, %p98
      %p101 = scmp.ne.s32.totalorder %s84, %s100
      %p102 = scmp.eq.s32.totalorder %s20, 0
      %p103 = por %p101, %p102
      %s104 = ssub.s32 %s21, %s33
      %s105 = ssub.s32 %s22, %s29
      %s106 = sor.u32 %s104, %s105
      %p107 = scmp.eq.s32.totalorder %s106, 0
      %s109 = sadd.s32 %s108, 1
      %s110 = scalar_select %p107, %s108, %s109
      %p113 = pneg %p107
      %p114 = scmp.eq.s32.totalorder %s14, 1
      %p115 = por %p113, %p114
      %p116 = scmp.ne.s32.totalorder %s108, %s111
      %p117 = scmp.eq.s32.totalorder %s14, 0
      %p118 = por %p116, %p117
      %p119 = scmp.ne.s32.totalorder %s108, %s111
      %p120 = scmp.eq.s32.totalorder %s19, 1
      %p121 = por %p119, %p120
      %p122 = scmp.ne.s32.totalorder %s111, %s112
      %p123 = scmp.eq.s32.totalorder %s19, 0
      %p124 = por %p122, %p123
      %p125 = scmp.ne.s32.totalorder %s111, %s112
      %p126 = scmp.eq.s32.totalorder %s20, 1
      %p127 = por %p125, %p126
      %p129 = scmp.ne.s32.totalorder %s112, %s128
      %p130 = scmp.eq.s32.totalorder %s20, 0
      %p131 = por %p129, %p130
      %p132 = scmp.le.s32.totalorder 1, %s14
      %p133 = scmp.lt.s32.totalorder %s14, 3
      %p134 = pnand %p132, %p133
      %p135 = pneg %p134
      // Predicated region
      $region9: #{tpu_custom_call.1} parent=5 // pred_check
        _
      $region10: #{tpu_custom_call.1} parent=5 // pred_check_branch
        %137 = sbr.rel (%p134) target = $region12
      $region11: #{tpu_custom_call.1} parent=5 // pred_region
        %s138 = ssub.s32 %s14, 1
        // Predicated region
        $region13: #{tpu_custom_call.1} parent=11 // pred_check
          %p139 = pneg %p47
        $region14: #{tpu_custom_call.1} parent=11 // pred_check_branch
          %141 = sbr.rel (%p139) target = $region16
        $region15: #{tpu_custom_call.1} parent=11 // pred_region
          %s143 = ssub.s32 128, 128
          %144 = vsyncadd [#allocation4], %s143
          %s146 = sshll.u32 %s0, 4
          %s147 = int_to_ptr.vmem [resolvable:$true] %s146
          %149 = dma.vmem_to_smem %s147, 128, [#allocation2], [#allocation4]
        $region16: #{tpu_custom_call.1} parent=11 // pred_fallthru
          _
        // Predicated region
        $region17: #{tpu_custom_call.1} parent=11 // pred_check
          %p150 = pneg %p68
        $region18: #{tpu_custom_call.1} parent=11 // pred_check_branch
          %152 = sbr.rel (%p150) target = $region20
        $region19: #{tpu_custom_call.1} parent=11 // pred_region
          %s154 = ssub.s32 16, 16
          %155 = vsyncadd [#allocation6], %s154
          %s157 = sshll.u32 %s1, 4
          %s158 = int_to_ptr.vmem [resolvable:$true] %s157
          %160 = dma.vmem_to_smem %s158, 16, [#allocation5], [#allocation6]
        $region20: #{tpu_custom_call.1} parent=11 // pred_fallthru
          _
      $region12: #{tpu_custom_call.1} parent=5 // pred_fallthru
        _
      %p161 = scmp.lt.s32.totalorder %s14, 2
      // Predicated region
      $region21: #{tpu_custom_call.1} parent=5 // pred_check
        %p162 = pneg %p161
      $region22: #{tpu_custom_call.1} parent=5 // pred_check_branch
        %164 = sbr.rel (%p162) target = $region24
      $region23: #{tpu_custom_call.1} parent=5 // pred_region
        // Predicated region
        $region25: #{tpu_custom_call.1} parent=23 // pred_check
          %p165 = pneg %p90
        $region26: #{tpu_custom_call.1} parent=23 // pred_check_branch
          %167 = sbr.rel (%p165) target = $region28
        $region27: #{tpu_custom_call.1} parent=23 // pred_region
          %s168 = smul.u32 2, %s22
          %p169 = scmp.lt.s32.totalorder %s21, 1
          %s170 = scalar_select %p169, %s21, 1
          %p171 = scmp.lt.s32.totalorder %s168, 1
          %s172 = scalar_select %p171, %s168, 1
          %s173 = smul.addr %s170, 2
          %s174 = sadd.s32 %s172, %s173
          %s175 = smul.addr %s174, 4
          %s176 = scalar_lea.vmem %s2, %s175
          %s177 = smul.u32 2, %s22
        $region28: #{tpu_custom_call.1} parent=23 // pred_fallthru
          _
      $region24: #{tpu_custom_call.1} parent=5 // pred_fallthru
        _
      %p178 = scmp.le.s32.totalorder 1, %s14
      %p179 = scmp.lt.s32.totalorder %s14, 3
      %p180 = pnand %p178, %p179
      %p181 = pneg %p180
      // Predicated region
      $region29: #{tpu_custom_call.1} parent=5 // pred_check
        _
      $region30: #{tpu_custom_call.1} parent=5 // pred_check_branch
        %183 = sbr.rel (%p180) target = $region32
      $region31: #{tpu_custom_call.1} parent=5 // pred_region
        %s184 = ssub.s32 %s14, 1
        // Predicated region
        $region33: #{tpu_custom_call.1} parent=31 // pred_check
          %p185 = pneg %p47
        $region34: #{tpu_custom_call.1} parent=31 // pred_check_branch
          %187 = sbr.rel (%p185) target = $region36
        $region35: #{tpu_custom_call.1} parent=31 // pred_region
          %188 = dma.done [#allocation4], 128
        $region36: #{tpu_custom_call.1} parent=31 // pred_fallthru
          _
        // Predicated region
        $region37: #{tpu_custom_call.1} parent=31 // pred_check
          %p189 = pneg %p68
        $region38: #{tpu_custom_call.1} parent=31 // pred_check_branch
          %191 = sbr.rel (%p189) target = $region40
        $region39: #{tpu_custom_call.1} parent=31 // pred_region
          %192 = dma.done [#allocation6], 16
        $region40: #{tpu_custom_call.1} parent=31 // pred_fallthru
          _
        %193 = sfence
        %p194 = pneg %p47
        %p195 = pneg %p44
        %p196 = pneg %p68
        %p197 = pneg %p65
        %s198 = smul.u32 2, %s24
        %p199 = scmp.lt.s32.totalorder %s23, 1
        %s200 = scalar_select %p199, %s23, 1
        %p201 = scmp.lt.s32.totalorder %s198, 1
        %s202 = scalar_select %p201, %s198, 1
        %s203 = smul.addr %s200, 2
        %s204 = sadd.s32 %s202, %s203
        %s205 = smul.addr %s204, 4
        %s206 = scalar_lea.vmem %s2, %s205
        %p207 = pneg %p96
        %p208 = pneg %p93
        %p209 = pneg %p124
        %p210 = pneg %p121
        %s211 = sand.u32 %s111, 1
        %s212 = scalar_lea.sflag [#allocation3], %s211
        %s213 = sand.u32 %s111, 1
        %s214 = smul.addr %s213, 16
        %s215 = scalar_lea.vmem [#allocation7], %s214
        %s216 = smul.u32 2, %s24
        %p217 = scmp.lt.s32.totalorder %s23, 1
        %s218 = scalar_select %p217, %s23, 1
        %p219 = scmp.lt.s32.totalorder %s216, 1
        %s220 = scalar_select %p219, %s216, 1
        %s221 = smul.addr %s218, 2
        %s222 = sadd.s32 %s220, %s221
        %s223 = smul.addr %s222, 4
        %s224 = scalar_lea.vmem %s2, %s223
        %s225 = smul.u32 2, %s24
        %s226 = smul.u32 2, %s24
        %v227 = vld [vmem:[%s224] sm:$0x77]
        %s228 = sld [smem:[#allocation2]]
        %v229 = vstv %s228
        %v230 = vmul.f32 %v227, %v229
        %s231 = sld [smem:[#allocation2 + $0x1]]
        %v232 = vstv %s231
        %v233 = vmul.f32 %v227, %v232
        %v235 = vrot.slane %v233, 5
        %v236 = vrot.slane %v235, 4
        %v238 = vadd.f32 %v230, %v236
        %s239 = sld [smem:[#allocation2 + $0x2]]
        %v240 = vstv %s239
        %v241 = vmul.f32 %v227, %v240
        %v243 = vrot.slane %v241, 6
        %v244 = vrot.slane %v243, 4
        %v246 = vadd.f32 %v238, %v244
        %s247 = sld [smem:[#allocation5]]
        %v248 = vstv %s247
        %v249 = vadd.f32 %v246, %v248
        %s250 = sld [smem:[#allocation2 + $0x80]]
        %v251 = vstv %s250
        %v252 = vmul.f32 %v227, %v251
        %s253 = sld [smem:[#allocation2 + $0x81]]
        %v254 = vstv %s253
        %v255 = vmul.f32 %v227, %v254
        %v257 = vrot.slane %v255, 5
        %v258 = vrot.slane %v257, 4
        %v260 = vadd.f32 %v252, %v258
        %s261 = sld [smem:[#allocation2 + $0x82]]
        %v262 = vstv %s261
        %v263 = vmul.f32 %v227, %v262
        %v265 = vrot.slane %v263, 6
        %v266 = vrot.slane %v265, 4
        %v268 = vadd.f32 %v260, %v266
        %s269 = sld [smem:[#allocation5 + $0x1]]
        %v270 = vstv %s269
        %v271 = vadd.f32 %v268, %v270
        %s272 = sld [smem:[#allocation2 + $0x100]]
        %v273 = vstv %s272
        %v274 = vmul.f32 %v227, %v273
        %s275 = sld [smem:[#allocation2 + $0x101]]
        %v276 = vstv %s275
        %v277 = vmul.f32 %v227, %v276
        %v279 = vrot.slane %v277, 5
        %v280 = vrot.slane %v279, 4
        %v282 = vadd.f32 %v274, %v280
        %s283 = sld [smem:[#allocation2 + $0x102]]
        %v284 = vstv %s283
        %v285 = vmul.f32 %v227, %v284
        %v287 = vrot.slane %v285, 6
        %v288 = vrot.slane %v287, 4
        %v290 = vadd.f32 %v282, %v288
        %s291 = sld [smem:[#allocation5 + $0x2]]
        %v292 = vstv %s291
        %v293 = vadd.f32 %v290, %v292
        %s294 = sld [smem:[#allocation2 + $0x180]]
        %v295 = vstv %s294
        %v296 = vmul.f32 %v227, %v295
        %s297 = sld [smem:[#allocation2 + $0x181]]
        %v298 = vstv %s297
        %v299 = vmul.f32 %v227, %v298
        %v301 = vrot.slane %v299, 5
        %v302 = vrot.slane %v301, 4
        %v304 = vadd.f32 %v296, %v302
        %s305 = sld [smem:[#allocation2 + $0x182]]
        %v306 = vstv %s305
        %v307 = vmul.f32 %v227, %v306
        %v309 = vrot.slane %v307, 6
        %v310 = vrot.slane %v309, 4
        %v312 = vadd.f32 %v304, %v310
        %s313 = sld [smem:[#allocation5 + $0x3]]
        %v314 = vstv %s313
        %v315 = vadd.f32 %v312, %v314
        %s316 = sld [smem:[#allocation2 + $0x200]]
        %v317 = vstv %s316
        %v318 = vmul.f32 %v227, %v317
        %s319 = sld [smem:[#allocation2 + $0x201]]
        %v320 = vstv %s319
        %v321 = vmul.f32 %v227, %v320
        %v323 = vrot.slane %v321, 5
        %v324 = vrot.slane %v323, 4
        %v326 = vadd.f32 %v318, %v324
        %s327 = sld [smem:[#allocation2 + $0x202]]
        %v328 = vstv %s327
        %v329 = vmul.f32 %v227, %v328
        %v331 = vrot.slane %v329, 6
        %v332 = vrot.slane %v331, 4
        %v334 = vadd.f32 %v326, %v332
        %s335 = sld [smem:[#allocation5 + $0x4]]
        %v336 = vstv %s335
        %v337 = vadd.f32 %v334, %v336
        %s338 = sld [smem:[#allocation2 + $0x280]]
        %v339 = vstv %s338
        %v340 = vmul.f32 %v227, %v339
        %s341 = sld [smem:[#allocation2 + $0x281]]
        %v342 = vstv %s341
        %v343 = vmul.f32 %v227, %v342
        %v345 = vrot.slane %v343, 5
        %v346 = vrot.slane %v345, 4
        %v348 = vadd.f32 %v340, %v346
        %s349 = sld [smem:[#allocation2 + $0x282]]
        %v350 = vstv %s349
        %v351 = vmul.f32 %v227, %v350
        %v353 = vrot.slane %v351, 6
        %v354 = vrot.slane %v353, 4
        %v356 = vadd.f32 %v348, %v354
        %s357 = sld [smem:[#allocation5 + $0x5]]
        %v358 = vstv %s357
        %v359 = vadd.f32 %v356, %v358
        %s360 = sld [smem:[#allocation2 + $0x300]]
        %v361 = vstv %s360
        %v362 = vmul.f32 %v227, %v361
        %s363 = sld [smem:[#allocation2 + $0x301]]
        %v364 = vstv %s363
        %v365 = vmul.f32 %v227, %v364
        %v367 = vrot.slane %v365, 5
        %v368 = vrot.slane %v367, 4
        %v370 = vadd.f32 %v362, %v368
        %s371 = sld [smem:[#allocation2 + $0x302]]
        %v372 = vstv %s371
        %v373 = vmul.f32 %v227, %v372
        %v375 = vrot.slane %v373, 6
        %v376 = vrot.slane %v375, 4
        %v378 = vadd.f32 %v370, %v376
        %s379 = sld [smem:[#allocation5 + $0x6]]
        %v380 = vstv %s379
        %v381 = vadd.f32 %v378, %v380
        %s382 = sld [smem:[#allocation2 + $0x380]]
        %v383 = vstv %s382
        %v384 = vmul.f32 %v227, %v383
        %s385 = sld [smem:[#allocation2 + $0x381]]
        %v386 = vstv %s385
        %v387 = vmul.f32 %v227, %v386
        %v389 = vrot.slane %v387, 5
        %v390 = vrot.slane %v389, 4
        %v392 = vadd.f32 %v384, %v390
        %s393 = sld [smem:[#allocation2 + $0x382]]
        %v394 = vstv %s393
        %v395 = vmul.f32 %v227, %v394
        %v397 = vrot.slane %v395, 6
        %v398 = vrot.slane %v397, 4
        %v400 = vadd.f32 %v392, %v398
        %s401 = sld [smem:[#allocation5 + $0x7]]
        %v402 = vstv %s401
        %v403 = vadd.f32 %v400, %v402
        %v405 = vlaneseq
        %v406 = vshrl.u32 %v405, 7
        %v407 = vsub.s32 0, %v406
        %v408 = vrot.slane %v249, %v407
        %v409 = vlaneseq
        %v410 = vshrl.u32 %v409, 7
        %v411 = vsub.s32 4, %v410
        %v412 = vrot.slane %v249, %v411
        %v416 = vlaneseq
        %v417 = vshrl.u32 %v416, 7
        %v418 = vsub.s32 0, %v417
        %v419 = vrot.slane %v271, %v418
        %v420 = vlaneseq
        %v421 = vshrl.u32 %v420, 7
        %v422 = vsub.s32 4, %v421
        %v423 = vrot.slane %v271, %v422
        %v427 = vlaneseq
        %v428 = vshrl.u32 %v427, 7
        %v429 = vsub.s32 0, %v428
        %v430 = vrot.slane %v293, %v429
        %v431 = vlaneseq
        %v432 = vshrl.u32 %v431, 7
        %v433 = vsub.s32 4, %v432
        %v434 = vrot.slane %v293, %v433
        %v438 = vlaneseq
        %v439 = vshrl.u32 %v438, 7
        %v440 = vsub.s32 0, %v439
        %v441 = vrot.slane %v315, %v440
        %v442 = vlaneseq
        %v443 = vshrl.u32 %v442, 7
        %v444 = vsub.s32 4, %v443
        %v445 = vrot.slane %v315, %v444
        %v449 = vlaneseq
        %v450 = vshrl.u32 %v449, 7
        %v451 = vsub.s32 0, %v450
        %v452 = vrot.slane %v337, %v451
        %v453 = vlaneseq
        %v454 = vshrl.u32 %v453, 7
        %v455 = vsub.s32 4, %v454
        %v456 = vrot.slane %v337, %v455
        %v460 = vlaneseq
        %v461 = vshrl.u32 %v460, 7
        %v462 = vsub.s32 0, %v461
        %v463 = vrot.slane %v359, %v462
        %v464 = vlaneseq
        %v465 = vshrl.u32 %v464, 7
        %v466 = vsub.s32 4, %v465
        %v467 = vrot.slane %v359, %v466
        %v471 = vlaneseq
        %v472 = vshrl.u32 %v471, 7
        %v473 = vsub.s32 0, %v472
        %v474 = vrot.slane %v381, %v473
        %v475 = vlaneseq
        %v476 = vshrl.u32 %v475, 7
        %v477 = vsub.s32 4, %v476
        %v478 = vrot.slane %v381, %v477
        %v482 = vlaneseq
        %v483 = vshrl.u32 %v482, 7
        %v484 = vsub.s32 0, %v483
        %v485 = vrot.slane %v403, %v484
        %v486 = vlaneseq
        %v487 = vshrl.u32 %v486, 7
        %v488 = vsub.s32 4, %v487
        %v489 = vrot.slane %v403, %v488
        %vm492 = vcmask 1040384
        %v493 = vsel %vm492, %v408, %v419
        %v494 = vsel %vm492, %v412, %v423
        %vm495 = vcmask 1041408
        %v496 = vsel %vm495, %v493, %v430
        %v497 = vsel %vm495, %v494, %v434
        %vm498 = vcmask 1042432
        %v499 = vsel %vm498, %v496, %v441
        %v500 = vsel %vm498, %v497, %v445
        %vm501 = vcmask 1043456
        %v502 = vsel %vm501, %v499, %v452
        %v503 = vsel %vm501, %v500, %v456
        %vm504 = vcmask 1044480
        %v505 = vsel %vm504, %v502, %v463
        %v506 = vsel %vm504, %v503, %v467
        %vm507 = vcmask 1045504
        %v508 = vsel %vm507, %v505, %v474
        %v509 = vsel %vm507, %v506, %v478
        %vm510 = vcmask 1046528
        %v511 = vsel %vm510, %v508, %v485
        %v512 = vsel %vm510, %v509, %v489
        %513 = vst [vmem:[%s215] sm:$0xff] %v511
        %514 = vst [vmem:[%s215 + $0x8] sm:$0xff] %v512
        %s515 = sand.u32 %s111, 1
        %s516 = scalar_lea.sflag [#allocation3], %s515
        %s517 = sand.u32 %s111, 1
        %s518 = smul.addr %s517, 16
        %s519 = scalar_lea.vmem [#allocation7], %s518
        // Predicated region
        $region41: #{tpu_custom_call.1} parent=31 // pred_check
          %p520 = pneg %p121
        $region42: #{tpu_custom_call.1} parent=31 // pred_check_branch
          %522 = sbr.rel (%p520) target = $region44
        $region43: #{tpu_custom_call.1} parent=31 // pred_region
          %s523 = smul.u32 2, %s24
          %s525 = ssub.s32 256, 256
          %526 = vsyncadd %s516, %s525
          %s527 = smul.addr %s23, 2
          %s528 = sadd.s32 %s523, %s527
          %s529 = smul.addr %s528, 128
          %s530 = scalar_lea.hbm %s3, %s529
          %s532 = sshll.u32 %s519, 4
          %s533 = int_to_ptr.vmem [resolvable:$true] %s532
          %535 = dma.vmem_to_hbm [thread:$0]  %s533, 256, %s530, %s516
        $region44: #{tpu_custom_call.1} parent=31 // pred_fallthru
          _
      $region32: #{tpu_custom_call.1} parent=5 // pred_fallthru
        _
      %p536 = scmp.le.s32.totalorder 2, %s14
      // Predicated region
      $region45: #{tpu_custom_call.1} parent=5 // pred_check
        %p537 = pneg %p536
      $region46: #{tpu_custom_call.1} parent=5 // pred_check_branch
        %539 = sbr.rel (%p537) target = $region48
      $region47: #{tpu_custom_call.1} parent=5 // pred_region
        %s540 = ssub.s32 %s14, 2
        // Predicated region
        $region49: #{tpu_custom_call.1} parent=47 // pred_check
          %p541 = pneg %p127
        $region50: #{tpu_custom_call.1} parent=47 // pred_check_branch
          %543 = sbr.rel (%p541) target = $region52
        $region51: #{tpu_custom_call.1} parent=47 // pred_region
          %s544 = sand.u32 %s112, 1
          %s545 = scalar_lea.sflag [#allocation3], %s544
          %s546 = sand.u32 %s112, 1
          %s547 = smul.addr %s546, 16
          %s548 = scalar_lea.vmem [#allocation7], %s547
          %549 = dma.done %s545, 256
        $region52: #{tpu_custom_call.1} parent=47 // pred_fallthru
          _
      $region48: #{tpu_custom_call.1} parent=5 // pred_fallthru
        _
    $region6: #{tpu_custom_call.1} parent=1 // loop_footer
      %s18 = sadd.s32 1, %s14
    $region7: #{tpu_custom_call.1} parent=1 // loop_footer_branch
      %13 = sbr.rel target = $region3
    $region8: #{tpu_custom_call.1} parent=1 // loop_exit
      _
    %550 = vsyncpa [#allocation3], 1
    %s551 = scalar_lea.sflag [#allocation3], 1
    %552 = vsyncpa %s551, 1
    %553 = vsyncpa [#allocation4], 1
    %s554 = scalar_lea.sflag [#allocation4], 1
    %555 = vsyncpa %s554, 1
    %556 = vsyncpa [#allocation6], 1

</llo_original>
